<compile_context>
chip_gen: v6e
topology: v6e:2x2x1
jax: 0.10.0
libtpu: 0.0.40
codegen_flags: <defaults>
</compile_context>

<pallas_src>
import jax
import jax.numpy as jnp
from jax.experimental import pallas as pl
from jax.experimental.pallas import tpu as pltpu

EPS = 1e-10


def _l2norm_kernel(x_ref, w_ref, o_ref):
    # x_ref: (1, C, TILE_HW)  input tile (native dtype)
    # w_ref: (1, C, 1)        per-channel scale, f32, resident across grid
    # o_ref: (1, C, TILE_HW)  output tile
    x = x_ref[...].astype(jnp.float32)                 # no-op for f32 input
    sq_sum = jnp.sum(x * x, axis=1, keepdims=True)     # (1, 1, TILE_HW)
    # eps added AFTER the sqrt, exactly like the PyTorch module.
    inv_norm = pl.reciprocal(jnp.sqrt(sq_sum) + EPS, approx=True)  # EUP slot
    y = x * inv_norm * w_ref[...]                      # broadcast over C / HW
    o_ref[...] = y.astype(o_ref.dtype)


def _pick_tile_hw(hw: int, c: int, itemsize: int, target_bytes: int = 2 << 20) -> int:
    """Largest lane tile (multiple of 128) giving ~target_bytes per input block."""
    lanes = (target_bytes // max(1, c * itemsize)) // 128 * 128
    lanes = max(128, lanes)
    return hw if hw <= lanes else lanes


def l2norm(x_nchw: jax.Array, weight: jax.Array) -> jax.Array:
    """x_nchw: (N, C, H, W); weight: (C,) per-channel scale. Returns (N, C, H, W)."""
    n, c, h, w = x_nchw.shape
    hw = h * w

    # Free reshapes: (N, C, H, W) and (N, C, H*W) share the same row-major layout.
    x3 = x_nchw.reshape(n, c, hw)
    w3 = weight.astype(jnp.float32).reshape(1, c, 1)   # pre-cast once, hoisted

    tile_hw = _pick_tile_hw(hw, c, jnp.dtype(x_nchw.dtype).itemsize)
    grid = (n, pl.cdiv(hw, tile_hw))

    out3 = pl.pallas_call(
        _l2norm_kernel,
        out_shape=jax.ShapeDtypeStruct((n, c, hw), x_nchw.dtype),
        grid_spec=pltpu.PrefetchScalarGridSpec(
            num_scalar_prefetch=0,
            grid=grid,
            in_specs=[
                pl.BlockSpec((1, c, tile_hw), lambda i, j: (i, 0, j)),
                pl.BlockSpec((1, c, 1), lambda i, j: (0, 0, 0)),
            ],
            out_specs=pl.BlockSpec((1, c, tile_hw), lambda i, j: (i, 0, j)),
        ),
        compiler_params=pltpu.CompilerParams(
            dimension_semantics=("parallel", "parallel"),
            vmem_limit_bytes=32 * 1024 * 1024,
        ),
    )(x3, w3)

    return out3.reshape(n, c, h, w)


def l2norm_ref(x_nchw, weight):
    # Pure-JAX reference mirroring the PyTorch forward.
    xf = x_nchw.astype(jnp.float32)
    norm = jnp.sqrt(jnp.sum(xf * xf, axis=1, keepdims=True)) + EPS
    y = xf / norm
    return (weight.reshape(1, -1, 1, 1).astype(jnp.float32) * y).astype(x_nchw.dtype)


if __name__ == "__main__":
    key = jax.random.PRNGKey(0)
    N, C, H, W = 2, 4, 16, 16
    GAMMA = 20.0  # SSD's usual scale init: nn.init.constant_(weight, gamma)

    x = jax.random.normal(key, (N, C, H, W), dtype=jnp.float32)
    weight = jnp.full((C,), GAMMA, dtype=jnp.float32)

    out = jax.block_until_ready(jax.jit(l2norm)(x, weight))
    ref = l2norm_ref(x, weight)

    assert out.shape == (N, C, H, W)
    # The approximate EUP reciprocal introduces a small *multiplicative*
    # relative error, so rtol is the meaningful bound; atol stays tight.
    assert jnp.allclose(out, ref, rtol=2e-2, atol=1e-5), "mismatch vs reference"

    print("KERNEL_OK")
</pallas_src>

<mosaic_0001>
module attributes {stable_mosaic.version = 11 : i64} {
  func.func @_l2norm_kernel(%arg0: i32, %arg1: i32, %arg2: memref<1x4x256xf32, #tpu.memory_space<vmem>>, %arg3: memref<1x4x1xf32, #tpu.memory_space<vmem>>, %arg4: memref<1x4x256xf32, #tpu.memory_space<vmem>>) attributes {dimension_semantics = [#tpu.dimension_semantics<parallel>, #tpu.dimension_semantics<parallel>], iteration_bounds = array<i64: 2, 1>, scalar_prefetch = 0 : i64, scratch_operands = 0 : i64, tpu.core_type = #tpu.core_type<tc>, window_params = [{transform_indices = @transform_0, window_bounds = array<i64: 1, 4, 256>}, {pipeline_mode = #tpu.pipeline_mode<synchronous>, transform_indices = @transform_1, window_bounds = array<i64: 1, 4, 1>}, {transform_indices = @transform_2, window_bounds = array<i64: 1, 4, 256>}]} {
    %c0 = arith.constant 0 : index
    %c0_0 = arith.constant 0 : index
    %c0_1 = arith.constant 0 : index
    %0 = vector.load %arg2[%c0, %c0_0, %c0_1] : memref<1x4x256xf32, #tpu.memory_space<vmem>>, vector<1x4x256xf32>
    %1 = arith.mulf %0, %0 : vector<1x4x256xf32>
    %cst = arith.constant dense<0.000000e+00> : vector<1x256xf32>
    %2 = vector.multi_reduction <add>, %1, %cst [1] : vector<1x4x256xf32> to vector<1x256xf32>
    %3 = vector.shape_cast %2 : vector<1x256xf32> to vector<1x1x256xf32>
    %4 = math.sqrt %3 : vector<1x1x256xf32>
    %cst_2 = arith.constant 1.000000e-10 : f32
    %5 = vector.broadcast %cst_2 : f32 to vector<1x1x256xf32>
    %6 = arith.addf %4, %5 : vector<1x1x256xf32>
    %7 = tpu.reciprocal %6 {approx = true} : vector<1x1x256xf32> -> vector<1x1x256xf32>
    %8 = vector.broadcast %7 : vector<1x1x256xf32> to vector<1x4x256xf32>
    %9 = arith.mulf %0, %8 : vector<1x4x256xf32>
    %c0_3 = arith.constant 0 : index
    %c0_4 = arith.constant 0 : index
    %c0_5 = arith.constant 0 : index
    %10 = vector.load %arg3[%c0_3, %c0_4, %c0_5] : memref<1x4x1xf32, #tpu.memory_space<vmem>>, vector<1x4x1xf32>
    %11 = vector.broadcast %10 : vector<1x4x1xf32> to vector<1x4x256xf32>
    %12 = arith.mulf %9, %11 : vector<1x4x256xf32>
    %c0_6 = arith.constant 0 : index
    %c0_7 = arith.constant 0 : index
    %c0_8 = arith.constant 0 : index
    %13 = vector.load %arg4[%c0_6, %c0_7, %c0_8] : memref<1x4x256xf32, #tpu.memory_space<vmem>>, vector<1x4x256xf32>
    tpu.vector_store %arg4[%c0_6, %c0_7, %c0_8], %12 {strides = array<i32>} : memref<1x4x256xf32, #tpu.memory_space<vmem>>, vector<1x4x256xf32>,
    return
  }
  func.func @transform_0(%arg0: i32, %arg1: i32) -> (i32, i32, i32) {
    %c0_i32 = arith.constant 0 : i32
    %c0_i32_0 = arith.constant 0 : i32
    return %arg0, %c0_i32, %arg1 : i32, i32, i32
  }
  func.func @transform_1(%arg0: i32, %arg1: i32) -> (i32, i32, i32) {
    %c0_i32 = arith.constant 0 : i32
    %c0_i32_0 = arith.constant 0 : i32
    %c0_i32_1 = arith.constant 0 : i32
    %c0_i32_2 = arith.constant 0 : i32
    return %c0_i32, %c0_i32_0, %c0_i32_1 : i32, i32, i32
  }
  func.func @transform_2(%arg0: i32, %arg1: i32) -> (i32, i32, i32) {
    %c0_i32 = arith.constant 0 : i32
    %c0_i32_0 = arith.constant 0 : i32
    return %arg0, %c0_i32, %arg1 : i32, i32, i32
  }
}

</mosaic_0001>

<llo_original>
// kernel: l2norm.1
$region0: #{l2norm.1}
  #allocation0 [shape = 'u32[]', space=smem, size = 0x4, offset = 0x4, fixed_abs, tag = 'smem constant byte address 0x4 - core index']
  #allocation1 [shape = 'u32[144,128]{1,0:T(1,128)}', space=vmem, size = 0x12000, scoped, tag = 'internal scratch']
  %s0 = inlined_call_operand.vmem [shape: f32[2,4,256], index: 0, kind: input, shape index: {}]
  %s1 = inlined_call_operand.vmem [shape: f32[1,4,1], index: 1, kind: input, shape index: {}]
  %s2 = inlined_call_operand.vmem [shape: f32[2,4,256], index: 2, kind: output, shape index: {}]
  %s3 = sld [smem:[#allocation0]]
  $region41: #{l2norm.1} parent=0
    _
  %s5 = ssub.s32 1, %s3
  %s6 = scalar_select 0, %s5, %s3
  loop: start=0, step=1, limit=4
  $region2: #{l2norm.1} parent=0 // loop_pre_header
    _
  $region3: #{l2norm.1} parent=0 // loop_header
    %s8 = sphi 0, %s12
    %p9 = scmp.ge.s32.totalorder %s8, 4
    %s15 = sphi 0, %s27
    %s16 = sphi 0, %s23
    %s17 = sphi 0, %s15
    %s18 = sphi 0, %s16
    %s19 = sphi 0, %s17
    %s20 = sphi 0, %s18
    %s32 = sphi 0, %s34
    %s35 = sphi 0, %s32
    %s36 = sphi 0, %s35
    %s52 = sphi 0, %s36
    %s56 = sphi 0, %s56
    %s58 = sphi 0, %s56
    %s59 = sphi 0, %s58
    %s73 = sphi 0, %s59
    %s81 = sphi 0, %s83
    %s84 = sphi 0, %s81
    %s85 = sphi 0, %s84
    %s101 = sphi 0, %s85
  $region4: #{l2norm.1} parent=0 // loop_header_branch
    %11 = sbr.rel (%p9) target = $region8
  $region5: #{l2norm.1} parent=0 // loop_body
    %s13 = ssub.s32 %s8, 1
    %s14 = ssub.s32 %s8, 2
    %s21 = sadd.s32 1, %s16
    %p22 = scmp.ge.s32.totalorder %s21, 1
    %s23 = scalar_select %p22, 0, %s21
    %s24 = sadd.s32 1, %s15
    %s25 = scalar_select %p22, %s24, %s15
    %p26 = scmp.ge.s32.totalorder %s25, 2
    %s27 = scalar_select %p26, 0, %s25
    %s28 = ssub.s32 %s15, %s27
    %s29 = ssub.s32 %s16, %s23
    %s30 = sor.u32 %s28, %s29
    %p31 = scmp.eq.s32.totalorder %s30, 0
    %s33 = sadd.s32 %s32, 1
    %s34 = scalar_select %p31, %s32, %s33
    %p37 = pneg %p31
    %p38 = scmp.eq.s32.totalorder %s8, 1
    %p39 = por %p37, %p38
    %p40 = scmp.ne.s32.totalorder %s32, %s35
    %p41 = scmp.eq.s32.totalorder %s8, 0
    %p42 = por %p40, %p41
    %p43 = scmp.ne.s32.totalorder %s32, %s35
    %p44 = scmp.eq.s32.totalorder %s13, 1
    %p45 = por %p43, %p44
    %p46 = scmp.ne.s32.totalorder %s35, %s36
    %p47 = scmp.eq.s32.totalorder %s13, 0
    %p48 = por %p46, %p47
    %p49 = scmp.ne.s32.totalorder %s35, %s36
    %p50 = scmp.eq.s32.totalorder %s14, 1
    %p51 = por %p49, %p50
    %p53 = scmp.ne.s32.totalorder %s36, %s52
    %p54 = scmp.eq.s32.totalorder %s14, 0
    %p55 = por %p53, %p54
    %s57 = sadd.s32 %s56, 1
    %p60 = scmp.eq.s32.totalorder %s8, 1
    %p61 = scmp.ne.s32.totalorder %s56, %s58
    %p62 = scmp.eq.s32.totalorder %s8, 0
    %p63 = por %p61, %p62
    %p64 = scmp.ne.s32.totalorder %s56, %s58
    %p65 = scmp.eq.s32.totalorder %s13, 1
    %p66 = por %p64, %p65
    %p67 = scmp.ne.s32.totalorder %s58, %s59
    %p68 = scmp.eq.s32.totalorder %s13, 0
    %p69 = por %p67, %p68
    %p70 = scmp.ne.s32.totalorder %s58, %s59
    %p71 = scmp.eq.s32.totalorder %s14, 1
    %p72 = por %p70, %p71
    %p74 = scmp.ne.s32.totalorder %s59, %s73
    %p75 = scmp.eq.s32.totalorder %s14, 0
    %p76 = por %p74, %p75
    %s77 = ssub.s32 %s15, %s27
    %s78 = ssub.s32 %s16, %s23
    %s79 = sor.u32 %s77, %s78
    %p80 = scmp.eq.s32.totalorder %s79, 0
    %s82 = sadd.s32 %s81, 1
    %s83 = scalar_select %p80, %s81, %s82
    %p86 = pneg %p80
    %p87 = scmp.eq.s32.totalorder %s8, 1
    %p88 = por %p86, %p87
    %p89 = scmp.ne.s32.totalorder %s81, %s84
    %p90 = scmp.eq.s32.totalorder %s8, 0
    %p91 = por %p89, %p90
    %p92 = scmp.ne.s32.totalorder %s81, %s84
    %p93 = scmp.eq.s32.totalorder %s13, 1
    %p94 = por %p92, %p93
    %p95 = scmp.ne.s32.totalorder %s84, %s85
    %p96 = scmp.eq.s32.totalorder %s13, 0
    %p97 = por %p95, %p96
    %p98 = scmp.ne.s32.totalorder %s84, %s85
    %p99 = scmp.eq.s32.totalorder %s14, 1
    %p100 = por %p98, %p99
    %p102 = scmp.ne.s32.totalorder %s85, %s101
    %p103 = scmp.eq.s32.totalorder %s14, 0
    %p104 = por %p102, %p103
    %p105 = scmp.le.s32.totalorder 1, %s8
    %p106 = scmp.lt.s32.totalorder %s8, 3
    %p107 = pnand %p105, %p106
    %p108 = pneg %p107
    // Predicated region
    $region9: #{l2norm.1} parent=5 // pred_check
      _
    $region10: #{l2norm.1} parent=5 // pred_check_branch
      %110 = sbr.rel (%p107) target = $region12
    $region11: #{l2norm.1} parent=5 // pred_region
      %s111 = ssub.s32 %s8, 1
      // Predicated region
      $region13: #{l2norm.1} parent=11 // pred_check
        %p112 = pneg %p69
      $region14: #{l2norm.1} parent=11 // pred_check_branch
        %114 = sbr.rel (%p112) target = $region16
      $region15: #{l2norm.1} parent=11 // pred_region
        _
      $region16: #{l2norm.1} parent=11 // pred_fallthru
        _
    $region12: #{l2norm.1} parent=5 // pred_fallthru
      _
    %p115 = scmp.lt.s32.totalorder %s8, 2
    // Predicated region
    $region17: #{l2norm.1} parent=5 // pred_check
      %p116 = pneg %p115
    $region18: #{l2norm.1} parent=5 // pred_check_branch
      %118 = sbr.rel (%p116) target = $region20
    $region19: #{l2norm.1} parent=5 // pred_region
      // Predicated region
      $region21: #{l2norm.1} parent=19 // pred_check
        %p119 = pneg %p42
      $region22: #{l2norm.1} parent=19 // pred_check_branch
        %121 = sbr.rel (%p119) target = $region24
      $region23: #{l2norm.1} parent=19 // pred_region
        %s122 = smul.u32 2, %s16
        %p123 = scmp.lt.s32.totalorder %s15, 1
        %s124 = scalar_select %p123, %s15, 1
        %p125 = scmp.lt.s32.totalorder %s122, 1
        %s126 = scalar_select %p125, %s122, 1
        %s127 = smul.addr %s124, 2
        %s128 = sadd.s32 %s126, %s127
        %s129 = smul.addr %s128, 4
        %s130 = scalar_lea.vmem %s0, %s129
        %s131 = smul.u32 2, %s16
      $region24: #{l2norm.1} parent=19 // pred_fallthru
        _
    $region20: #{l2norm.1} parent=5 // pred_fallthru
      _
    %p132 = scmp.le.s32.totalorder 1, %s8
    %p133 = scmp.lt.s32.totalorder %s8, 3
    %p134 = pnand %p132, %p133
    %p135 = pneg %p134
    // Predicated region
    $region25: #{l2norm.1} parent=5 // pred_check
      _
    $region26: #{l2norm.1} parent=5 // pred_check_branch
      %137 = sbr.rel (%p134) target = $region28
    $region27: #{l2norm.1} parent=5 // pred_region
      %s138 = ssub.s32 %s8, 1
      %s139 = smul.u32 2, %s18
      %p140 = scmp.lt.s32.totalorder %s17, 1
      %s141 = scalar_select %p140, %s17, 1
      %p142 = scmp.lt.s32.totalorder %s139, 1
      %s143 = scalar_select %p142, %s139, 1
      %s144 = smul.addr %s141, 2
      %s145 = sadd.s32 %s143, %s144
      %s146 = smul.addr %s145, 4
      %s147 = scalar_lea.vmem %s0, %s146
      %p148 = pneg %p48
      %p149 = pneg %p45
      %p150 = pneg %p69
      %p151 = pneg %p66
      %p152 = pneg %p97
      %p153 = pneg %p94
      %s154 = smul.u32 2, %s18
      %p155 = scmp.lt.s32.totalorder %s17, 1
      %s156 = scalar_select %p155, %s17, 1
      %p157 = scmp.lt.s32.totalorder %s154, 1
      %s158 = scalar_select %p157, %s154, 1
      %s159 = smul.addr %s156, 2
      %s160 = sadd.s32 %s158, %s159
      %s161 = smul.addr %s160, 4
      %s162 = scalar_lea.vmem %s2, %s161
      %s163 = smul.u32 2, %s18
      %p164 = scmp.lt.s32.totalorder %s17, 1
      %s165 = scalar_select %p164, %s17, 1
      %p166 = scmp.lt.s32.totalorder %s163, 1
      %s167 = scalar_select %p166, %s163, 1
      %s168 = smul.addr %s165, 2
      %s169 = sadd.s32 %s167, %s168
      %s170 = smul.addr %s169, 4
      %s171 = scalar_lea.vmem %s0, %s170
      %s172 = smul.u32 2, %s18
      %s173 = smul.u32 2, %s18
      %p174 = scmp.lt.s32.totalorder %s17, 1
      %s175 = scalar_select %p174, %s17, 1
      %p176 = scmp.lt.s32.totalorder %s173, 1
      %s177 = scalar_select %p176, %s173, 1
      %s178 = smul.addr %s175, 2
      %s179 = sadd.s32 %s177, %s178
      %s180 = smul.addr %s179, 4
      %s181 = scalar_lea.vmem %s2, %s180
      %s182 = smul.u32 2, %s18
      %v183 = vld [vmem:[%s171] sm:$0xff]
      %v184 = vmul.f32 %v183, %v183
      %v186 = vcombine.high %v184, %v184
      %vm188 = vcmask 1043456
      %v189 = vsel %vm188, %v184, 0.0
      %v190 = vrot.slane %v189, 4
      %v191 = vadd.f32 %v189, %v190
      %v192 = vrot.slane %v191, 2
      %v193 = vadd.f32 %v191, %v192
      %v194 = vrot.slane %v193, 1
      %v195 = vadd.f32 %v193, %v194
      %v196 = vsel %vm188, %v186, 0.0
      %v197 = vrot.slane %v196, 4
      %v198 = vadd.f32 %v196, %v197
      %v199 = vrot.slane %v198, 2
      %v200 = vadd.f32 %v198, %v199
      %v201 = vrot.slane %v200, 1
      %v202 = vadd.f32 %v200, %v201
      %v203 = vrsqrt.pop %v195
      %v204 = vmul.f32 %v195, %v203
      %vm205 = vcmp.eq.f32.partialorder %v195, inf
      %v206 = vsel %vm205, %v195, %v204
      %vm207 = vcmp.eq.f32.partialorder %v195, 0.0
      %v208 = vand.u32 %v195, 2147483648
      %v209 = vsel %vm207, %v208, %v206
      %v210 = vrsqrt.pop %v202
      %v211 = vmul.f32 %v202, %v210
      %vm212 = vcmp.eq.f32.partialorder %v202, inf
      %v213 = vsel %vm212, %v202, %v211
      %vm214 = vcmp.eq.f32.partialorder %v202, 0.0
      %v215 = vand.u32 %v202, 2147483648
      %v216 = vsel %vm214, %v215, %v213
      %v217 = vadd.f32 %v209, 1e-10
      %v218 = vadd.f32 %v216, 1e-10
      %v219 = vrcp.pop %v217
      %v220 = vrcp.pop %v218
      %v223 = vcombine.low %v219, %v220
      %v225 = vmul.f32 %v183, %v223
      %v226 = vld [vmem:[%s1] sm:$0xf]
      %228 = vset.pattern.permute.xlu0 0
      %229 = vperm.xlu0 %228, %v226
      %v230 = vpop.permute.xlu0 %229
      %v232 = vunpack.c.l.s4 839922192
      %v233 = vunpack.c.0.s8 %v232
      %v234 = vlaneseq
      %v235 = vshrl.u32 %v234, 7
      %v236 = vsub.s32 %v233, %v235
      %v237 = vrot.slane %v230, %v236
      %v239 = vmul.f32 %v225, %v237
      %240 = vst [vmem:[%s181] sm:$0xff] %v239
      %s241 = smul.u32 2, %s18
      %p242 = scmp.lt.s32.totalorder %s17, 1
      %s243 = scalar_select %p242, %s17, 1
      %p244 = scmp.lt.s32.totalorder %s241, 1
      %s245 = scalar_select %p244, %s241, 1
      %s246 = smul.addr %s243, 2
      %s247 = sadd.s32 %s245, %s246
      %s248 = smul.addr %s247, 4
      %s249 = scalar_lea.vmem %s2, %s248
      // Predicated region
      $region29: #{l2norm.1} parent=27 // pred_check
        %p250 = pneg %p94
      $region30: #{l2norm.1} parent=27 // pred_check_branch
        %252 = sbr.rel (%p250) target = $region32
      $region31: #{l2norm.1} parent=27 // pred_region
        %s253 = smul.u32 2, %s18
      $region32: #{l2norm.1} parent=27 // pred_fallthru
        _
    $region28: #{l2norm.1} parent=5 // pred_fallthru
      _
    %p254 = scmp.le.s32.totalorder 2, %s8
    // Predicated region
    $region33: #{l2norm.1} parent=5 // pred_check
      %p255 = pneg %p254
    $region34: #{l2norm.1} parent=5 // pred_check_branch
      %257 = sbr.rel (%p255) target = $region36
    $region35: #{l2norm.1} parent=5 // pred_region
      %s258 = ssub.s32 %s8, 2
      // Predicated region
      $region37: #{l2norm.1} parent=35 // pred_check
        %p259 = pneg %p100
      $region38: #{l2norm.1} parent=35 // pred_check_branch
        %261 = sbr.rel (%p259) target = $region40
      $region39: #{l2norm.1} parent=35 // pred_region
        %s262 = smul.u32 2, %s20
        %p263 = scmp.lt.s32.totalorder %s19, 1
        %s264 = scalar_select %p263, %s19, 1
        %p265 = scmp.lt.s32.totalorder %s262, 1
        %s266 = scalar_select %p265, %s262, 1
        %s267 = smul.addr %s264, 2
        %s268 = sadd.s32 %s266, %s267
        %s269 = smul.addr %s268, 4
        %s270 = scalar_lea.vmem %s2, %s269
      $region40: #{l2norm.1} parent=35 // pred_fallthru
        _
    $region36: #{l2norm.1} parent=5 // pred_fallthru
      _
  $region6: #{l2norm.1} parent=0 // loop_footer
    %s12 = sadd.s32 1, %s8
  $region7: #{l2norm.1} parent=0 // loop_footer_branch
    %7 = sbr.rel target = $region3
  $region8: #{l2norm.1} parent=0 // loop_exit
    _

</llo_original>
